<compile_context>
chip_gen: v7x
topology: tpu7x:2x2x1
jax: 0.10.0
libtpu: 0.0.40
codegen_flags: <defaults>
</compile_context>

<pallas_src>
import itertools

import numpy as np
import jax
import jax.numpy as jnp
from jax.experimental import pallas as pl
from jax.experimental.pallas import tpu as pltpu

try:  # prefer scipy's C solver when present; fall back to a pure-Python JV solver.
    from scipy.optimize import linear_sum_assignment as _scipy_lsa
except Exception:  # pragma: no cover - environment without scipy
    _scipy_lsa = None

# ---- matcher hyper-parameters (module __init__ defaults, args.fb_label='01') ----
FOREGROUND_LABEL = 0      # args.fb_label == '01' -> foreground_label = 0
COST_CLASS = 1.0
COST_SPAN = 1.0
COST_GIOU = 1.0
SPAN_LOSS_TYPE = "l1"     # only the 'l1' branch is exercised here
_EPS = 1e-6               # clamp for degenerate / padded spans (keeps costs finite)


def _matcher_cost_kernel(pred_ref, tgt_ref, c_ref):
    """Per-block cost: C = w_span*L1 + w_giou*(-gIoU) + w_class*(-p_fg).

    pred_ref: [B_BLK, nq_pad, 4]     columns = (logit_fg, logit_bg, center, width)
    tgt_ref:  [B_BLK, 2, T_PAD]      rows    = (center, width), lane-padded with zeros
    c_ref:    [B_BLK, nq_pad, T_PAD]
    """
    pred = pred_ref[...].astype(jnp.float32)             # [B, nqp, 4]
    l_fg = pred[:, :, 0:1]                                # [B, nqp, 1]
    l_bg = pred[:, :, 1:2]
    pc = pred[:, :, 2:3]
    pw = pred[:, :, 3:4]

    tgt = tgt_ref[...].astype(jnp.float32)                # [B, 2, T]
    tc = tgt[:, 0:1, :]                                   # [B, 1, T]
    tw = tgt[:, 1:2, :]

    # ---- classification cost: 2-class softmax specialized to a sigmoid ----
    # p_fg = softmax(logits)[fg] = 1 / (1 + exp(l_bg - l_fg)).  exp + approx reciprocal
    # both run on the EUP (idle otherwise).  exp may overflow to +inf for extreme logit
    # gaps; 1/(1+inf) -> 0 is the correct limit, no NaNs.
    p_fg = pl.reciprocal(1.0 + jnp.exp(l_bg - l_fg), approx=True)      # [B, nqp, 1]
    # Per-(b,q) bias folded once: COST_CLASS * (-p_fg)  +  COST_GIOU (the "-1" of gIoU).
    bias = COST_GIOU - COST_CLASS * p_fg                                # [B, nqp, 1]

    # ---- span L1 cost (cdist in (c, w) space) ----
    cost = COST_SPAN * (jnp.abs(pc - tc) + jnp.abs(pw - tw))            # [B, nqp, T]

    # ---- generalized temporal IoU cost (simplified algebra) ----
    #   union     = (pe - ps) + (te - ts) - inter = pw + tw - inter
    #   enclosing = max(pe, te) - min(ps, ts)                (always >= inter >= 0)
    #   gIoU      = inter/union - (enclosing - union)/enclosing
    #             = inter*inv_union + union*inv_enc - 1      ("-1" lives in `bias`)
    ps = pc - 0.5 * pw
    pe = pc + 0.5 * pw
    ts = tc - 0.5 * tw
    te = tc + 0.5 * tw
    inter = jnp.maximum(jnp.minimum(pe, te) - jnp.maximum(ps, ts), 0.0)
    union = (pw + tw) - inter
    enclosing = jnp.maximum(pe, te) - jnp.minimum(ps, ts)
    # eps-clamped approx (EUP) reciprocals; keeps padded / zero-width spans finite.
    inv_union = pl.reciprocal(jnp.maximum(union, _EPS), approx=True)
    inv_enc = pl.reciprocal(jnp.maximum(enclosing, _EPS), approx=True)

    cost = cost - COST_GIOU * (inter * inv_union + union * inv_enc)
    c_ref[...] = (cost + bias).astype(c_ref.dtype)


def _choose_batch_block(bs, nq_pad, t_pad, out_bytes=4):
    """Pick the per-step batch block so each step writes >= ~512 KiB of output while
    the double-buffered blocks fit a conservative VMEM budget, keeping >= 2 grid steps
    (when bs >= 2) so both v7x TensorCores get work."""
    out_block = nq_pad * t_pad * out_bytes
    per_batch = 2 * (out_block + nq_pad * 4 * 4 + 2 * t_pad * 4)   # double-buffered
    vmem_budget = 12 * 1024 * 1024   # fits v7x (32 MiB scoped) and v5e (16 MiB scoped)
    vmem_cap = max(1, vmem_budget // max(per_batch, 1))
    target = max(1, (512 * 1024) // max(out_block, 1))
    b_blk = min(bs, vmem_cap, target)
    if bs >= 2:
        b_blk = min(b_blk, (bs + 1) // 2)   # keep >= 2 grid steps for v7x megacore
    return max(1, b_blk)


def matcher_cost_matrix(pred_logits, pred_spans, targets, out_dtype=jnp.float32):
    """Pallas matching-cost matrix.

    pred_logits: [bs, nq, 2]; pred_spans: [bs, nq, 2] (c, w);
    targets:     [bs, max_targets, 2] (c, w), width == 0 marks padding slots.
    Returns [bs, nq, max_targets] (out_dtype); only the columns corresponding to a
    batch's valid targets are meaningful (caller compacts by the width != 0 mask).
    Pass out_dtype=jnp.bfloat16 on bandwidth-limited v5e to halve the writeback stream.
    """
    bs, nq, nc = pred_logits.shape
    assert nc == 2, "matcher expects binary fg/bg logits"
    max_t = targets.shape[1]
    t_pad = max(128, pl.cdiv(max_t, 128) * 128)   # lane-dense output columns
    nq_pad = pl.cdiv(nq, 8) * 8                   # sublane-dense output rows

    fg = FOREGROUND_LABEL
    l_fg = pred_logits[..., fg:fg + 1]
    l_bg = pred_logits[..., 1 - fg:2 - fg]
    # One packed prediction operand: (l_fg, l_bg, c, w).
    pred_packed = jnp.concatenate(
        [l_fg, l_bg, pred_spans], axis=-1).astype(jnp.float32)              # [bs, nq, 4]
    if nq_pad != nq:
        pred_packed = jnp.pad(pred_packed, ((0, 0), (0, nq_pad - nq), (0, 0)))
    # One packed, lane-padded target operand: rows = (center, width).
    tgt_packed = jnp.transpose(targets.astype(jnp.float32), (0, 2, 1))      # [bs, 2, max_t]
    tgt_packed = jnp.pad(tgt_packed, ((0, 0), (0, 0), (0, t_pad - max_t)))  # [bs, 2, T_PAD]

    out_bytes = np.dtype(out_dtype).itemsize
    b_blk = _choose_batch_block(bs, nq_pad, t_pad, out_bytes)
    n_steps = pl.cdiv(bs, b_blk)
    bs_pad = n_steps * b_blk
    if bs_pad != bs:   # zero padding stays finite thanks to the eps clamps
        pred_packed = jnp.pad(pred_packed, ((0, bs_pad - bs), (0, 0), (0, 0)))
        tgt_packed = jnp.pad(tgt_packed, ((0, bs_pad - bs), (0, 0), (0, 0)))

    cost_estimate = pl.CostEstimate(
        flops=16 * bs_pad * nq_pad * t_pad,
        transcendentals=2 * bs_pad * nq_pad + 2 * bs_pad * nq_pad * t_pad,
        bytes_accessed=(4 * bs_pad * (nq_pad * 4 + 2 * t_pad)
                        + out_bytes * bs_pad * nq_pad * t_pad),
    )

    cost = pl.pallas_call(
        _matcher_cost_kernel,
        out_shape=jax.ShapeDtypeStruct((bs_pad, nq_pad, t_pad), out_dtype),
        grid=(n_steps,),
        in_specs=[
            pl.BlockSpec((b_blk, nq_pad, 4), lambda b: (b, 0, 0)),
            pl.BlockSpec((b_blk, 2, t_pad), lambda b: (b, 0, 0)),
        ],
        out_specs=pl.BlockSpec((b_blk, nq_pad, t_pad), lambda b: (b, 0, 0)),
        compiler_params=pltpu.CompilerParams(
            dimension_semantics=("parallel",)),      # batch grid -> 2-TC megacore on v7x
        cost_estimate=cost_estimate,
    )(pred_packed, tgt_packed)

    # Slice all padding away on device so D2H only moves [bs, nq, max_t].
    return cost[:bs, :nq, :max_t]


def _lsa_fallback(cost):
    """Min-cost assignment for a rectangular matrix (Jonker-Volgenant / Hungarian,
    O(n^2 m)); pure-Python fallback when scipy is unavailable."""
    n_rows, n_cols = cost.shape
    if n_rows == 0 or n_cols == 0:
        return np.zeros((0,), np.int64), np.zeros((0,), np.int64)
    transposed = n_rows > n_cols
    if transposed:
        cost = cost.T
        n_rows, n_cols = n_cols, n_rows
    u = np.zeros(n_rows + 1)
    v = np.zeros(n_cols + 1)
    p = np.zeros(n_cols + 1, dtype=np.int64)      # p[j]: row matched to column j (1-based)
    way = np.zeros(n_cols + 1, dtype=np.int64)
    for i in range(1, n_rows + 1):
        p[0] = i
        j0 = 0
        minv = np.full(n_cols + 1, np.inf)
        used = np.zeros(n_cols + 1, dtype=bool)
        while True:
            used[j0] = True
            i0 = p[j0]
            delta = np.inf
            j1 = 0
            for j in range(1, n_cols + 1):
                if used[j]:
                    continue
                cur = cost[i0 - 1, j - 1] - u[i0] - v[j]
                if cur < minv[j]:
                    minv[j] = cur
                    way[j] = j0
                if minv[j] < delta:
                    delta = minv[j]
                    j1 = j
            for j in range(n_cols + 1):
                if used[j]:
                    u[p[j]] += delta
                    v[j] -= delta
                else:
                    minv[j] -= delta
            j0 = j1
            if p[j0] == 0:
                break
        while j0 != 0:
            j1 = way[j0]
            p[j0] = p[j1]
            j0 = j1
    rows, cols = [], []
    for j in range(1, n_cols + 1):
        if p[j] != 0:
            rows.append(p[j] - 1)
            cols.append(j - 1)
    row_ind = np.asarray(rows, dtype=np.int64)
    col_ind = np.asarray(cols, dtype=np.int64)
    if transposed:
        row_ind, col_ind = col_ind, row_ind
    order = np.argsort(row_ind)
    return row_ind[order], col_ind[order]


def _linear_sum_assignment(cost):
    """scipy.optimize.linear_sum_assignment-compatible solver."""
    cost = np.asarray(cost, dtype=np.float64)
    if _scipy_lsa is not None:
        r, c = _scipy_lsa(cost)
        return np.asarray(r, np.int64), np.asarray(c, np.int64)
    return _lsa_fallback(cost)


def hungarian_matcher_forward(pred_logits, pred_spans, targets):
    """Full forward: Pallas cost matrix + host-side Hungarian assignment.

    Returns a list (len bs) of (index_i, index_j) int64 numpy arrays, with
    len(index_i) = len(index_j) = min(num_queries, num_valid_targets_b).
    """
    bs = pred_logits.shape[0]
    cost = matcher_cost_matrix(pred_logits, pred_spans, targets)   # [bs, nq, max_t]
    # TODO(synk): linear_sum_assignment is data-dependent host control flow with no
    # Pallas equivalent; one small (already de-padded) D2H transfer, then a host solve.
    cost_np, targets_np = jax.device_get((cost, targets))
    indices = []
    for b in range(bs):
        valid_cols = np.nonzero(targets_np[b, :, 1] != 0)[0]       # compacted target order
        c_b = cost_np[b][:, valid_cols]                            # [nq, sizes[b]]
        indices.append(_linear_sum_assignment(c_b))
    return indices


# ------------------------- pure-NumPy references (tests) -------------------------

def _reference_cost_block(logits_b, spans_b, tgt_b):
    """Per-batch reference: softmax / L1-cdist / gIoU exactly as in the PyTorch module."""
    logits = logits_b.astype(np.float64)
    m = logits.max(-1, keepdims=True)
    e = np.exp(logits - m)
    prob = e / e.sum(-1, keepdims=True)
    cost_class = -prob[:, FOREGROUND_LABEL:FOREGROUND_LABEL + 1]           # [nq, 1]
    pc = spans_b[:, 0:1].astype(np.float64)
    pw = spans_b[:, 1:2].astype(np.float64)
    tc = tgt_b[None, :, 0].astype(np.float64)
    tw = tgt_b[None, :, 1].astype(np.float64)
    cost_span = np.abs(pc - tc) + np.abs(pw - tw)
    ps, pe = pc - 0.5 * pw, pc + 0.5 * pw
    ts, te = tc - 0.5 * tw, tc + 0.5 * tw
    inter = np.clip(np.minimum(pe, te) - np.maximum(ps, ts), 0.0, None)
    union = (pe - ps) + (te - ts) - inter
    iou = inter / union
    enc = np.clip(np.maximum(pe, te) - np.minimum(ps, ts), 0.0, None)
    giou = iou - (enc - union) / enc
    return COST_SPAN * cost_span - COST_GIOU * giou + COST_CLASS * cost_class


def _brute_force_optimal_cost(cost):
    n_rows, n_cols = cost.shape
    best = np.inf
    if n_cols <= n_rows:
        for rows in itertools.permutations(range(n_rows), n_cols):
            best = min(best, cost[list(rows), list(range(n_cols))].sum())
    else:
        for cols in itertools.permutations(range(n_cols), n_rows):
            best = min(best, cost[list(range(n_rows)), list(cols)].sum())
    return best


if __name__ == "__main__":
    key = jax.random.PRNGKey(0)
    bs, num_queries, num_classes, max_targets = 2, 8, 2, 4
    k1, k2, k3 = jax.random.split(key, 3)

    pred_logits = jax.random.normal(k1, (bs, num_queries, num_classes), jnp.float32)
    pred_spans = jax.random.uniform(k2, (bs, num_queries, 2), jnp.float32,
                                    minval=0.05, maxval=0.95)
    # targets: [bs, max_targets, 2] in (c, w); width == 0 marks padding slots.
    # Batch 1 has an interleaved padding slot to exercise the masked-target compaction.
    targets = jax.random.uniform(k3, (bs, max_targets, 2), jnp.float32,
                                 minval=0.1, maxval=0.9)
    valid = jnp.array([[1.0, 1.0, 1.0, 0.0],
                       [1.0, 0.0, 1.0, 0.0]], jnp.float32)
    targets = targets * valid[..., None]

    # --- kernel cost matrix + numeric check against a pure-NumPy reference ---
    cost = jax.block_until_ready(matcher_cost_matrix(pred_logits, pred_spans, targets))
    cost_np, logits_np, spans_np, targets_np = jax.device_get(
        (cost, pred_logits, pred_spans, targets))
    for b in range(bs):
        valid_cols = np.nonzero(targets_np[b, :, 1] != 0)[0]
        got = cost_np[b][:, valid_cols]
        want = _reference_cost_block(logits_np[b], spans_np[b], targets_np[b][valid_cols])
        # Tolerance loosened vs exact reference because the kernel uses approx (EUP)
        # reciprocals; the Hungarian assignment is insensitive to this level of error.
        np.testing.assert_allclose(got, want, rtol=1e-2, atol=1e-2)

    # --- full forward (kernel + host Hungarian) + optimality check ---
    matches = hungarian_matcher_forward(pred_logits, pred_spans, targets)
    for b, (i_idx, j_idx) in enumerate(matches):
        valid_cols = np.nonzero(targets_np[b, :, 1] != 0)[0]
        n_tgt = len(valid_cols)
        assert i_idx.dtype == np.int64 and j_idx.dtype == np.int64
        assert len(i_idx) == len(j_idx) == min(num_queries, n_tgt)
        c_b = cost_np[b][:, valid_cols]
        total = c_b[i_idx, j_idx].sum()
        assert abs(total - _brute_force_optimal_cost(c_b)) < 1e-5

    print("KERNEL_OK")
</pallas_src>

<mosaic_0001>
module attributes {stable_mosaic.version = 11 : i64} {
  func.func @_matcher_cost_kernel(%arg0: i32, %arg1: memref<1x8x4xf32, #tpu.memory_space<vmem>>, %arg2: memref<1x2x128xf32, #tpu.memory_space<vmem>>, %arg3: memref<1x8x128xf32, #tpu.memory_space<vmem>>) attributes {dimension_semantics = [#tpu.dimension_semantics<parallel>], iteration_bounds = array<i64: 2>, scalar_prefetch = 0 : i64, scratch_operands = 0 : i64, tpu.core_type = #tpu.core_type<tc>, window_params = [{transform_indices = @transform_0, window_bounds = array<i64: 1, 8, 4>}, {transform_indices = @transform_1, window_bounds = array<i64: 1, 2, 128>}, {transform_indices = @transform_2, window_bounds = array<i64: 1, 8, 128>}]} {
    %c0 = arith.constant 0 : index
    %c0_0 = arith.constant 0 : index
    %c0_1 = arith.constant 0 : index
    %0 = vector.load %arg1[%c0, %c0_0, %c0_1] : memref<1x8x4xf32, #tpu.memory_space<vmem>>, vector<1x8x4xf32>
    %1 = vector.extract_strided_slice %0 {offsets = [0, 0, 0], sizes = [1, 8, 1], strides = [1, 1, 1]} : vector<1x8x4xf32> to vector<1x8x1xf32>
    %2 = vector.extract_strided_slice %0 {offsets = [0, 0, 1], sizes = [1, 8, 1], strides = [1, 1, 1]} : vector<1x8x4xf32> to vector<1x8x1xf32>
    %3 = vector.extract_strided_slice %0 {offsets = [0, 0, 2], sizes = [1, 8, 1], strides = [1, 1, 1]} : vector<1x8x4xf32> to vector<1x8x1xf32>
    %4 = vector.extract_strided_slice %0 {offsets = [0, 0, 3], sizes = [1, 8, 1], strides = [1, 1, 1]} : vector<1x8x4xf32> to vector<1x8x1xf32>
    %c0_2 = arith.constant 0 : index
    %c0_3 = arith.constant 0 : index
    %c0_4 = arith.constant 0 : index
    %5 = vector.load %arg2[%c0_2, %c0_3, %c0_4] : memref<1x2x128xf32, #tpu.memory_space<vmem>>, vector<1x2x128xf32>
    %6 = vector.extract_strided_slice %5 {offsets = [0, 0, 0], sizes = [1, 1, 128], strides = [1, 1, 1]} : vector<1x2x128xf32> to vector<1x1x128xf32>
    %7 = vector.extract_strided_slice %5 {offsets = [0, 1, 0], sizes = [1, 1, 128], strides = [1, 1, 1]} : vector<1x2x128xf32> to vector<1x1x128xf32>
    %8 = arith.subf %2, %1 : vector<1x8x1xf32>
    %9 = math.exp %8 : vector<1x8x1xf32>
    %cst = arith.constant 1.000000e+00 : f32
    %10 = vector.broadcast %cst : f32 to vector<1x8x1xf32>
    %11 = arith.addf %10, %9 : vector<1x8x1xf32>
    %12 = tpu.reciprocal %11 {approx = true} : vector<1x8x1xf32> -> vector<1x8x1xf32>
    %cst_5 = arith.constant 1.000000e+00 : f32
    %13 = vector.broadcast %cst_5 : f32 to vector<1x8x1xf32>
    %14 = arith.mulf %13, %12 : vector<1x8x1xf32>
    %cst_6 = arith.constant 1.000000e+00 : f32
    %15 = vector.broadcast %cst_6 : f32 to vector<1x8x1xf32>
    %16 = arith.subf %15, %14 : vector<1x8x1xf32>
    %17 = vector.broadcast %3 : vector<1x8x1xf32> to vector<1x8x128xf32>
    %18 = vector.broadcast %6 : vector<1x1x128xf32> to vector<1x8x128xf32>
    %19 = arith.subf %17, %18 : vector<1x8x128xf32>
    %20 = math.absf %19 : vector<1x8x128xf32>
    %21 = vector.broadcast %4 : vector<1x8x1xf32> to vector<1x8x128xf32>
    %22 = vector.broadcast %7 : vector<1x1x128xf32> to vector<1x8x128xf32>
    %23 = arith.subf %21, %22 : vector<1x8x128xf32>
    %24 = math.absf %23 : vector<1x8x128xf32>
    %25 = arith.addf %20, %24 : vector<1x8x128xf32>
    %cst_7 = arith.constant 1.000000e+00 : f32
    %26 = vector.broadcast %cst_7 : f32 to vector<1x8x128xf32>
    %27 = arith.mulf %26, %25 : vector<1x8x128xf32>
    %cst_8 = arith.constant 5.000000e-01 : f32
    %28 = vector.broadcast %cst_8 : f32 to vector<1x8x1xf32>
    %29 = arith.mulf %28, %4 : vector<1x8x1xf32>
    %30 = arith.subf %3, %29 : vector<1x8x1xf32>
    %cst_9 = arith.constant 5.000000e-01 : f32
    %31 = vector.broadcast %cst_9 : f32 to vector<1x8x1xf32>
    %32 = arith.mulf %31, %4 : vector<1x8x1xf32>
    %33 = arith.addf %3, %32 : vector<1x8x1xf32>
    %cst_10 = arith.constant 5.000000e-01 : f32
    %34 = vector.broadcast %cst_10 : f32 to vector<1x1x128xf32>
    %35 = arith.mulf %34, %7 : vector<1x1x128xf32>
    %36 = arith.subf %6, %35 : vector<1x1x128xf32>
    %cst_11 = arith.constant 5.000000e-01 : f32
    %37 = vector.broadcast %cst_11 : f32 to vector<1x1x128xf32>
    %38 = arith.mulf %37, %7 : vector<1x1x128xf32>
    %39 = arith.addf %6, %38 : vector<1x1x128xf32>
    %40 = vector.broadcast %33 : vector<1x8x1xf32> to vector<1x8x128xf32>
    %41 = vector.broadcast %39 : vector<1x1x128xf32> to vector<1x8x128xf32>
    %42 = arith.minimumf %40, %41 : vector<1x8x128xf32>
    %43 = vector.broadcast %30 : vector<1x8x1xf32> to vector<1x8x128xf32>
    %44 = vector.broadcast %36 : vector<1x1x128xf32> to vector<1x8x128xf32>
    %45 = arith.maximumf %43, %44 : vector<1x8x128xf32>
    %46 = arith.subf %42, %45 : vector<1x8x128xf32>
    %cst_12 = arith.constant 0.000000e+00 : f32
    %47 = vector.broadcast %cst_12 : f32 to vector<1x8x128xf32>
    %48 = arith.maximumf %46, %47 : vector<1x8x128xf32>
    %49 = vector.broadcast %4 : vector<1x8x1xf32> to vector<1x8x128xf32>
    %50 = vector.broadcast %7 : vector<1x1x128xf32> to vector<1x8x128xf32>
    %51 = arith.addf %49, %50 : vector<1x8x128xf32>
    %52 = arith.subf %51, %48 : vector<1x8x128xf32>
    %53 = vector.broadcast %33 : vector<1x8x1xf32> to vector<1x8x128xf32>
    %54 = vector.broadcast %39 : vector<1x1x128xf32> to vector<1x8x128xf32>
    %55 = arith.maximumf %53, %54 : vector<1x8x128xf32>
    %56 = vector.broadcast %30 : vector<1x8x1xf32> to vector<1x8x128xf32>
    %57 = vector.broadcast %36 : vector<1x1x128xf32> to vector<1x8x128xf32>
    %58 = arith.minimumf %56, %57 : vector<1x8x128xf32>
    %59 = arith.subf %55, %58 : vector<1x8x128xf32>
    %cst_13 = arith.constant 9.99999997E-7 : f32
    %60 = vector.broadcast %cst_13 : f32 to vector<1x8x128xf32>
    %61 = arith.maximumf %52, %60 : vector<1x8x128xf32>
    %62 = tpu.reciprocal %61 {approx = true} : vector<1x8x128xf32> -> vector<1x8x128xf32>
    %cst_14 = arith.constant 9.99999997E-7 : f32
    %63 = vector.broadcast %cst_14 : f32 to vector<1x8x128xf32>
    %64 = arith.maximumf %59, %63 : vector<1x8x128xf32>
    %65 = tpu.reciprocal %64 {approx = true} : vector<1x8x128xf32> -> vector<1x8x128xf32>
    %66 = arith.mulf %48, %62 : vector<1x8x128xf32>
    %67 = arith.mulf %52, %65 : vector<1x8x128xf32>
    %68 = arith.addf %66, %67 : vector<1x8x128xf32>
    %cst_15 = arith.constant 1.000000e+00 : f32
    %69 = vector.broadcast %cst_15 : f32 to vector<1x8x128xf32>
    %70 = arith.mulf %69, %68 : vector<1x8x128xf32>
    %71 = arith.subf %27, %70 : vector<1x8x128xf32>
    %72 = vector.broadcast %16 : vector<1x8x1xf32> to vector<1x8x128xf32>
    %73 = arith.addf %71, %72 : vector<1x8x128xf32>
    %c0_16 = arith.constant 0 : index
    %c0_17 = arith.constant 0 : index
    %c0_18 = arith.constant 0 : index
    %74 = vector.load %arg3[%c0_16, %c0_17, %c0_18] : memref<1x8x128xf32, #tpu.memory_space<vmem>>, vector<1x8x128xf32>
    tpu.vector_store %arg3[%c0_16, %c0_17, %c0_18], %73 {strides = array<i32>} : memref<1x8x128xf32, #tpu.memory_space<vmem>>, vector<1x8x128xf32>,
    return
  }
  func.func @transform_0(%arg0: i32) -> (i32, i32, i32) {
    %c0_i32 = arith.constant 0 : i32
    %c0_i32_0 = arith.constant 0 : i32
    %c0_i32_1 = arith.constant 0 : i32
    return %arg0, %c0_i32, %c0_i32_0 : i32, i32, i32
  }
  func.func @transform_1(%arg0: i32) -> (i32, i32, i32) {
    %c0_i32 = arith.constant 0 : i32
    %c0_i32_0 = arith.constant 0 : i32
    %c0_i32_1 = arith.constant 0 : i32
    return %arg0, %c0_i32, %c0_i32_0 : i32, i32, i32
  }
  func.func @transform_2(%arg0: i32) -> (i32, i32, i32) {
    %c0_i32 = arith.constant 0 : i32
    %c0_i32_0 = arith.constant 0 : i32
    %c0_i32_1 = arith.constant 0 : i32
    return %arg0, %c0_i32, %c0_i32_0 : i32, i32, i32
  }
}

</mosaic_0001>

<llo_original>
// kernel: tpu_custom_call.1
$region0: #{tpu_custom_call.1}
  #allocation0 [shape = 'u32[]', space=smem, size = 0x4, offset = 0x4, fixed_abs, tag = 'smem constant byte address 0x4 - core index']
  #allocation1 [shape = 'u32[144,128]{1,0:T(1,128)}', space=vmem, size = 0x12000, scoped, tag = 'internal scratch']
  %s0 = inlined_call_operand.vmem [shape: f32[2,8,4], index: 0, kind: input, shape index: {}]
  %s1 = inlined_call_operand.vmem [shape: f32[2,2,128], index: 1, kind: input, shape index: {}]
  %s2 = inlined_call_operand.hbm [shape: f32[2,8,128], index: 2, kind: output, shape index: {}]
  %s3 = sld [smem:[#allocation0]]
  $region41: #{tpu_custom_call.1} parent=0
    _
  %s5 = ssub.s32 1, %s3
  %s6 = scalar_select 0, %s5, %s3
  $region1: #{tpu_custom_call.1} parent=0
    #allocation2 [shape = 'u8[8192]{0}', space=vmem, size = 0x2000, scoped, tag = 'output window, operand 0']
    #allocation3 [shape = 's32[2]{0}', space=sflag, size = 0x8, scoped, tag = 'scoped memory for tpu_custom_call.1']
    %7 = vsyncpa [#allocation3], 0
    %s8 = scalar_lea.sflag [#allocation3], 1
    %9 = vsyncpa %s8, 0
    loop: start=0, step=1, limit=4
    $region2: #{tpu_custom_call.1} parent=1 // loop_pre_header
      _
    $region3: #{tpu_custom_call.1} parent=1 // loop_header
      %s11 = sphi 0, %s15
      %p12 = scmp.ge.s32.totalorder %s11, 4
      %s21 = sphi 0, %s23
      %s24 = sphi 0, %s21
      %s25 = sphi 0, %s24
      %s41 = sphi 0, %s25
      %s47 = sphi 0, %s49
      %s50 = sphi 0, %s47
      %s51 = sphi 0, %s50
      %s67 = sphi 0, %s51
      %s73 = sphi 0, %s75
      %s76 = sphi 0, %s73
      %s77 = sphi 0, %s76
      %s93 = sphi 0, %s77
    $region4: #{tpu_custom_call.1} parent=1 // loop_header_branch
      %14 = sbr.rel (%p12) target = $region8
    $region5: #{tpu_custom_call.1} parent=1 // loop_body
      %s16 = ssub.s32 %s11, 1
      %s17 = ssub.s32 %s11, 2
      %s18 = sadd.s32 %s11, 1
      %s19 = ssub.s32 %s11, %s18
      %p20 = scmp.eq.s32.totalorder %s19, 0
      %s22 = sadd.s32 %s21, 1
      %s23 = scalar_select %p20, %s21, %s22
      %p26 = pneg %p20
      %p27 = scmp.eq.s32.totalorder %s11, 1
      %p28 = por %p26, %p27
      %p29 = scmp.ne.s32.totalorder %s21, %s24
      %p30 = scmp.eq.s32.totalorder %s11, 0
      %p31 = por %p29, %p30
      %p32 = scmp.ne.s32.totalorder %s21, %s24
      %p33 = scmp.eq.s32.totalorder %s16, 1
      %p34 = por %p32, %p33
      %p35 = scmp.ne.s32.totalorder %s24, %s25
      %p36 = scmp.eq.s32.totalorder %s16, 0
      %p37 = por %p35, %p36
      %p38 = scmp.ne.s32.totalorder %s24, %s25
      %p39 = scmp.eq.s32.totalorder %s17, 1
      %p40 = por %p38, %p39
      %p42 = scmp.ne.s32.totalorder %s25, %s41
      %p43 = scmp.eq.s32.totalorder %s17, 0
      %p44 = por %p42, %p43
      %s45 = ssub.s32 %s11, %s18
      %p46 = scmp.eq.s32.totalorder %s45, 0
      %s48 = sadd.s32 %s47, 1
      %s49 = scalar_select %p46, %s47, %s48
      %p52 = pneg %p46
      %p53 = scmp.eq.s32.totalorder %s11, 1
      %p54 = por %p52, %p53
      %p55 = scmp.ne.s32.totalorder %s47, %s50
      %p56 = scmp.eq.s32.totalorder %s11, 0
      %p57 = por %p55, %p56
      %p58 = scmp.ne.s32.totalorder %s47, %s50
      %p59 = scmp.eq.s32.totalorder %s16, 1
      %p60 = por %p58, %p59
      %p61 = scmp.ne.s32.totalorder %s50, %s51
      %p62 = scmp.eq.s32.totalorder %s16, 0
      %p63 = por %p61, %p62
      %p64 = scmp.ne.s32.totalorder %s50, %s51
      %p65 = scmp.eq.s32.totalorder %s17, 1
      %p66 = por %p64, %p65
      %p68 = scmp.ne.s32.totalorder %s51, %s67
      %p69 = scmp.eq.s32.totalorder %s17, 0
      %p70 = por %p68, %p69
      %s71 = ssub.s32 %s11, %s18
      %p72 = scmp.eq.s32.totalorder %s71, 0
      %s74 = sadd.s32 %s73, 1
      %s75 = scalar_select %p72, %s73, %s74
      %p78 = pneg %p72
      %p79 = scmp.eq.s32.totalorder %s11, 1
      %p80 = por %p78, %p79
      %p81 = scmp.ne.s32.totalorder %s73, %s76
      %p82 = scmp.eq.s32.totalorder %s11, 0
      %p83 = por %p81, %p82
      %p84 = scmp.ne.s32.totalorder %s73, %s76
      %p85 = scmp.eq.s32.totalorder %s16, 1
      %p86 = por %p84, %p85
      %p87 = scmp.ne.s32.totalorder %s76, %s77
      %p88 = scmp.eq.s32.totalorder %s16, 0
      %p89 = por %p87, %p88
      %p90 = scmp.ne.s32.totalorder %s76, %s77
      %p91 = scmp.eq.s32.totalorder %s17, 1
      %p92 = por %p90, %p91
      %p94 = scmp.ne.s32.totalorder %s77, %s93
      %p95 = scmp.eq.s32.totalorder %s17, 0
      %p96 = por %p94, %p95
      %p97 = scmp.le.s32.totalorder 1, %s11
      %p98 = scmp.lt.s32.totalorder %s11, 3
      %p99 = pnand %p97, %p98
      %p100 = pneg %p99
      // Predicated region
      $region9: #{tpu_custom_call.1} parent=5 // pred_check
        _
      $region10: #{tpu_custom_call.1} parent=5 // pred_check_branch
        %102 = sbr.rel (%p99) target = $region12
      $region11: #{tpu_custom_call.1} parent=5 // pred_region
        %s103 = ssub.s32 %s11, 1
      $region12: #{tpu_custom_call.1} parent=5 // pred_fallthru
        _
      %p104 = scmp.lt.s32.totalorder %s11, 2
      // Predicated region
      $region13: #{tpu_custom_call.1} parent=5 // pred_check
        %p105 = pneg %p104
      $region14: #{tpu_custom_call.1} parent=5 // pred_check_branch
        %107 = sbr.rel (%p105) target = $region16
      $region15: #{tpu_custom_call.1} parent=5 // pred_region
        // Predicated region
        $region17: #{tpu_custom_call.1} parent=15 // pred_check
          %p108 = pneg %p31
        $region18: #{tpu_custom_call.1} parent=15 // pred_check_branch
          %110 = sbr.rel (%p108) target = $region20
        $region19: #{tpu_custom_call.1} parent=15 // pred_region
          %p111 = scmp.lt.s32.totalorder %s11, 1
          %s112 = scalar_select %p111, %s11, 1
          %s113 = smul.addr %s112, 8
          %s114 = scalar_lea.vmem %s0, %s113
        $region20: #{tpu_custom_call.1} parent=15 // pred_fallthru
          _
        // Predicated region
        $region21: #{tpu_custom_call.1} parent=15 // pred_check
          %p115 = pneg %p57
        $region22: #{tpu_custom_call.1} parent=15 // pred_check_branch
          %117 = sbr.rel (%p115) target = $region24
        $region23: #{tpu_custom_call.1} parent=15 // pred_region
          %p118 = scmp.lt.s32.totalorder %s11, 1
          %s119 = scalar_select %p118, %s11, 1
          %s120 = smul.addr %s119, 2
          %s121 = scalar_lea.vmem %s1, %s120
        $region24: #{tpu_custom_call.1} parent=15 // pred_fallthru
          _
      $region16: #{tpu_custom_call.1} parent=5 // pred_fallthru
        _
      %p122 = scmp.le.s32.totalorder 1, %s11
      %p123 = scmp.lt.s32.totalorder %s11, 3
      %p124 = pnand %p122, %p123
      %p125 = pneg %p124
      // Predicated region
      $region25: #{tpu_custom_call.1} parent=5 // pred_check
        _
      $region26: #{tpu_custom_call.1} parent=5 // pred_check_branch
        %127 = sbr.rel (%p124) target = $region28
      $region27: #{tpu_custom_call.1} parent=5 // pred_region
        %s128 = ssub.s32 %s11, 1
        %p129 = scmp.lt.s32.totalorder %s16, 1
        %s130 = scalar_select %p129, %s16, 1
        %s131 = smul.addr %s130, 8
        %s132 = scalar_lea.vmem %s0, %s131
        %p133 = pneg %p37
        %p134 = pneg %p34
        %p135 = scmp.lt.s32.totalorder %s16, 1
        %s136 = scalar_select %p135, %s16, 1
        %s137 = smul.addr %s136, 2
        %s138 = scalar_lea.vmem %s1, %s137
        %p139 = pneg %p63
        %p140 = pneg %p60
        %p141 = pneg %p89
        %p142 = pneg %p86
        %s143 = sand.u32 %s76, 1
        %s144 = scalar_lea.sflag [#allocation3], %s143
        %s145 = sand.u32 %s76, 1
        %s146 = smul.addr %s145, 8
        %s147 = scalar_lea.vmem [#allocation2], %s146
        %p148 = scmp.lt.s32.totalorder %s16, 1
        %s149 = scalar_select %p148, %s16, 1
        %s150 = smul.addr %s149, 8
        %s151 = scalar_lea.vmem %s0, %s150
        %p152 = scmp.lt.s32.totalorder %s16, 1
        %s153 = scalar_select %p152, %s16, 1
        %s154 = smul.addr %s153, 2
        %s155 = scalar_lea.vmem %s1, %s154
        %v156 = vld [vmem:[%s151] sm:$0xff]
        %v157 = vld [vmem:[%s155] sm:$0x3]
        %159 = vrot.lane.b32.xlu0 %v156, 1
        %v160 = vpop.permute.xlu0 %159
        %v162 = vsub.f32 %v156, %v160
        %v163 = vmul.f32 %v162, 1.442695
        %v164 = vpow.pop %v163
        %v165 = vadd.f32 %v164, 1.0
        %v166 = vrcp.pop %v165
        %v167 = vsub.f32 1.0, %v166
        %168 = vset.pattern.permute.xlu0 2
        %169 = vperm.xlu0 %168, %v156
        %v170 = vpop.permute.xlu0 %169
        %v172 = vlaneseq
        %v173 = vshrl.u32 %v172, 7
        %v174 = vsub.s32 0, %v173
        %v175 = vrot.slane %v157, %v174
        %v176 = vsub.f32 %v170, %v175
        %v177 = vand.u32 2147483647, %v176
        %178 = vset.pattern.permute.xlu0 3
        %179 = vperm.xlu0 %178, %v156
        %v180 = vpop.permute.xlu0 %179
        %v182 = vlaneseq
        %v183 = vshrl.u32 %v182, 7
        %v184 = vsub.s32 1, %v183
        %v185 = vrot.slane %v157, %v184
        %v186 = vsub.f32 %v180, %v185
        %v187 = vand.u32 2147483647, %v186
        %v188 = vadd.f32 %v177, %v187
        %v189 = vmul.f32 %v156, 0.5
        %191 = vrot.lane.b32.xlu0 %v189, 127
        %v192 = vpop.permute.xlu0 %191
        %v194 = vsub.f32 %v156, %v192
        %v195 = vadd.f32 %v156, %v192
        %v196 = vmul.f32 %v157, 0.5
        %v198 = vrot.slane %v196, 1
        %v200 = vsub.f32 %v157, %v198
        %v201 = vadd.f32 %v157, %v198
        %203 = vset.pattern.permute.xlu0 2
        %204 = vperm.xlu0 %203, %v195
        %v205 = vpop.permute.xlu0 %204
        %v207 = vlaneseq
        %v208 = vshrl.u32 %v207, 7
        %v209 = vsub.s32 0, %v208
        %v210 = vrot.slane %v201, %v209
        %v211 = vmin.f32 %v205, %v210
        %213 = vset.pattern.permute.xlu0 2
        %214 = vperm.xlu0 %213, %v194
        %v215 = vpop.permute.xlu0 %214
        %v217 = vlaneseq
        %v218 = vshrl.u32 %v217, 7
        %v219 = vsub.s32 0, %v218
        %v220 = vrot.slane %v200, %v219
        %v221 = vmax.f32 %v215, %v220
        %v222 = vsub.f32 %v211, %v221
        %v223 = vmax.f32 %v222, 0.0
        %v224 = vadd.f32 %v180, %v185
        %v225 = vsub.f32 %v224, %v223
        %v226 = vmax.f32 %v205, %v210
        %v227 = vmin.f32 %v215, %v220
        %v228 = vsub.f32 %v226, %v227
        %v229 = vmax.f32 %v225, 1e-06
        %v230 = vrcp.pop %v229
        %v231 = vmax.f32 %v228, 1e-06
        %v232 = vrcp.pop %v231
        %v233 = vmul.f32 %v223, %v230
        %v234 = vmul.f32 %v225, %v232
        %v235 = vadd.f32 %v233, %v234
        %v236 = vsub.f32 %v188, %v235
        %238 = vset.pattern.permute.xlu0 1
        %239 = vperm.xlu0 %238, %v167
        %v240 = vpop.permute.xlu0 %239
        %v242 = vadd.f32 %v236, %v240
        %243 = vst [vmem:[%s147] sm:$0xff] %v242
        %s244 = sand.u32 %s76, 1
        %s245 = scalar_lea.sflag [#allocation3], %s244
        %s246 = sand.u32 %s76, 1
        %s247 = smul.addr %s246, 8
        %s248 = scalar_lea.vmem [#allocation2], %s247
        // Predicated region
        $region29: #{tpu_custom_call.1} parent=27 // pred_check
          %p249 = pneg %p86
        $region30: #{tpu_custom_call.1} parent=27 // pred_check_branch
          %251 = sbr.rel (%p249) target = $region32
        $region31: #{tpu_custom_call.1} parent=27 // pred_region
          %s253 = ssub.s32 128, 128
          %254 = vsyncadd %s245, %s253
          %s255 = smul.addr %s16, 128
          %s256 = scalar_lea.hbm %s2, %s255
          %s258 = sshll.u32 %s248, 4
          %s259 = int_to_ptr.vmem [resolvable:$true] %s258
          %261 = dma.vmem_to_hbm [thread:$0]  %s259, 128, %s256, %s245
        $region32: #{tpu_custom_call.1} parent=27 // pred_fallthru
          _
      $region28: #{tpu_custom_call.1} parent=5 // pred_fallthru
        _
      %p262 = scmp.le.s32.totalorder 2, %s11
      // Predicated region
      $region33: #{tpu_custom_call.1} parent=5 // pred_check
        %p263 = pneg %p262
      $region34: #{tpu_custom_call.1} parent=5 // pred_check_branch
        %265 = sbr.rel (%p263) target = $region36
      $region35: #{tpu_custom_call.1} parent=5 // pred_region
        %s266 = ssub.s32 %s11, 2
        // Predicated region
        $region37: #{tpu_custom_call.1} parent=35 // pred_check
          %p267 = pneg %p92
        $region38: #{tpu_custom_call.1} parent=35 // pred_check_branch
          %269 = sbr.rel (%p267) target = $region40
        $region39: #{tpu_custom_call.1} parent=35 // pred_region
          %s270 = sand.u32 %s77, 1
          %s271 = scalar_lea.sflag [#allocation3], %s270
          %s272 = sand.u32 %s77, 1
          %s273 = smul.addr %s272, 8
          %s274 = scalar_lea.vmem [#allocation2], %s273
          %275 = dma.done %s271, 128
        $region40: #{tpu_custom_call.1} parent=35 // pred_fallthru
          _
      $region36: #{tpu_custom_call.1} parent=5 // pred_fallthru
        _
    $region6: #{tpu_custom_call.1} parent=1 // loop_footer
      %s15 = sadd.s32 1, %s11
    $region7: #{tpu_custom_call.1} parent=1 // loop_footer_branch
      %10 = sbr.rel target = $region3
    $region8: #{tpu_custom_call.1} parent=1 // loop_exit
      _
    %276 = vsyncpa [#allocation3], 1
    %s277 = scalar_lea.sflag [#allocation3], 1
    %278 = vsyncpa %s277, 1

</llo_original>
